<compile_context>
chip_gen: v5e
topology: v5e:2x2
jax: 0.10.0
libtpu: 0.0.40
codegen_flags: <defaults>
</compile_context>

<pallas_src>
import functools

import jax
import jax.numpy as jnp
import numpy as np
from jax.experimental import pallas as pl
from jax.experimental.pallas import tpu as pltpu

GAMMA = 0.3    # compression exponent of SpectralLoss
EPS = 1e-12    # magnitude clamp


def _round_up(x: int, m: int) -> int:
    return ((x + m - 1) // m) * m


def _spec_loss_kernel(ft_ref, fp_ref, basis_ref, out_ref, *,
                      tn, n_valid, fold, c_mag, c_cplx, need_mask):
    """One grid step: a tile of frames for both signals.

    ft_ref, fp_ref : (tn, W)     bf16 framed true / pred signals
    basis_ref      : (W, 2*Fp)   bf16 window-scaled [cos | -sin] DFT basis
                                 (freq padded to Fp, zero columns)
    out_ref        : (1, 8, 128) f32 per-lane partial of the weighted SE sum
                                 (row-replicated; only row 0 is read back)
    """
    ft = ft_ref[...]
    fp = fp_ref[...]

    if need_mask:
        # Zero rows beyond the true frame count (last partial block holds
        # undefined data past the array end).  Zero frames contribute exactly
        # 0 to the loss, so no pad pass over HBM is needed.
        row0 = pl.program_id(0) * tn
        rows = jax.lax.broadcasted_iota(jnp.int32, (tn, 1), 0) + row0
        valid = rows < n_valid
        zero = jnp.zeros((), dtype=ft.dtype)
        ft = jnp.where(valid, ft, zero)
        fp = jnp.where(valid, fp, zero)

    basis = basis_ref[...]
    fp_half = basis.shape[-1] // 2  # static: padded freq count Fp

    # Single fused (window + DFT) bf16 MXU matmul per signal, f32 accumulation.
    yt = jnp.dot(ft, basis, preferred_element_type=jnp.float32)  # (tn, 2*Fp)
    yp = jnp.dot(fp, basis, preferred_element_type=jnp.float32)

    # Lane-aligned static slices (Fp is a multiple of 128) -> free.
    yt_re = yt[:, :fp_half]
    yt_im = yt[:, fp_half:]
    yp_re = yp[:, :fp_half]
    yp_im = yp[:, fp_half:]

    # |S|^2 clamped at EPS^2; one log + two exps per signal (EUP) give the
    # compressed magnitude |S|^g and the complex-compression scale |S|^(g-1).
    mt2 = jnp.maximum(yt_re * yt_re + yt_im * yt_im, EPS * EPS)
    mp2 = jnp.maximum(yp_re * yp_re + yp_im * yp_im, EPS * EPS)
    lt = jnp.log(mt2)
    lp = jnp.log(mp2)
    atg = jnp.exp((0.5 * GAMMA) * lt)          # |Yt|^g
    apg = jnp.exp((0.5 * GAMMA) * lp)          # |Yp|^g
    st = jnp.exp((0.5 * (GAMMA - 1.0)) * lt)   # |Yt|^(g-1)
    sp = jnp.exp((0.5 * (GAMMA - 1.0)) * lp)   # |Yp|^(g-1)

    dm = apg - atg
    d_re = yp_re * sp - yt_re * st
    d_im = yp_im * sp - yt_im * st
    # Loss weights and mean denominators are folded into c_mag / c_cplx, so a
    # single combined partial sum is enough.
    comb = c_mag * (dm * dm) + c_cplx * (d_re * d_re + d_im * d_im)

    # Per-lane partial sums only: one sublane reduction + static 128-lane folds
    # (no cross-lane XLU all-reduce, no per-step iota/where tile construction).
    col = jnp.sum(comb, axis=0, keepdims=True)        # (1, Fp)
    lane = col[:, 0:128]
    for g in range(1, fold):
        lane = lane + col[:, g * 128:(g + 1) * 128]
    out_ref[...] = jnp.broadcast_to(lane.reshape(1, 1, 128), (1, 8, 128))


def _frame(x, winlen, hop):
    """(B, T) -> (B * n_frames, winlen) overlapping frames, gather-free.

    Valid because hop == winlen // 2: every frame is the concatenation of two
    consecutive hop-sized contiguous chunks.
    """
    b, t = x.shape
    n_halves = t // hop
    assert n_halves >= 2, "signal shorter than one window"
    xh = x[:, : n_halves * hop].reshape(b, n_halves, hop)
    frames = jnp.concatenate([xh[:, :-1, :], xh[:, 1:, :]], axis=-1)
    n_frames = n_halves - 1
    return frames.reshape(b * n_frames, winlen), n_frames


class ComplexCompressedSpecMSE:
    def __init__(self, winlen: int, fs: int, f_fade_low: int, f_fade_high: int,
                 lf_complex_loss_weight: float, frame_tile: int = 256):
        assert winlen % 2 == 0, "winlen must be even"
        assert frame_tile % 16 == 0 and frame_tile >= 16
        self.winlen = winlen
        self.hop = winlen // 2
        self.fs = fs                      # stored (unused in forward, as in torch)
        self.f_fade_low = f_fade_low      # stored (unused in forward)
        self.f_fade_high = f_fade_high    # stored (unused in forward)
        self.w = float(lf_complex_loss_weight)
        self.frame_tile = frame_tile

        n_freq = winlen // 2 + 1
        fp_pad = _round_up(n_freq, 128)   # lane-pad freq dim to 128 multiple
        n = np.arange(winlen, dtype=np.float64)[:, None]
        k = np.arange(n_freq, dtype=np.float64)[None, :]
        ang = 2.0 * np.pi * n * k / winlen
        # Periodic Hann window (torch.hann_window default) folded into the basis.
        win = 0.5 * (1.0 - np.cos(2.0 * np.pi * np.arange(winlen) / winlen))
        basis = np.zeros((winlen, 2 * fp_pad), dtype=np.float32)
        basis[:, :n_freq] = win[:, None] * np.cos(ang)
        basis[:, fp_pad:fp_pad + n_freq] = win[:, None] * -np.sin(ang)
        # bf16 basis for the MXU (f32 emulated matmul is 4-8x slower on all
        # three generations); accumulation stays f32 inside the kernel.
        self.basis = jnp.asarray(basis).astype(jnp.bfloat16)  # (W, 2*Fp)
        self.n_freq = n_freq
        self.fp_pad = fp_pad

    def _step_bytes(self, tn: int) -> int:
        """Rough per-step VMEM estimate for a tile of tn frames."""
        w = self.winlen
        two_fp = 2 * self.fp_pad
        in_bufs = 2 * 2 * tn * w * 2        # 2 signals x double-buffered bf16 tiles
        basis_bufs = 2 * w * two_fp * 2     # double-buffered bf16 basis (const index)
        out_bufs = 2 * 8 * 128 * 4
        temps = 10 * tn * self.fp_pad * 4   # f32 spectra + per-bin temporaries
        return in_bufs + basis_bufs + out_bufs + temps

    @functools.partial(jax.jit, static_argnums=0)
    def __call__(self, y_true, y_pred):
        if y_true.ndim == 1:
            y_true = y_true[None, :]
            y_pred = y_pred[None, :]

        # bf16 framed signals: halves frame materialization + kernel DMA bytes
        # and feeds the MXU natively; post-matmul math stays f32.
        ft, _ = _frame(y_true.astype(jnp.bfloat16), self.winlen, self.hop)
        fp_, _ = _frame(y_pred.astype(jnp.bfloat16), self.winlen, self.hop)

        n_total, w = ft.shape              # true frame count (mean denominator)
        n_rows = n_total
        min_rows = 16                      # bf16 sublane packing granule
        if n_rows < min_rows:              # tiny-input fallback only
            ft = jnp.pad(ft, ((0, min_rows - n_rows), (0, 0)))
            fp_ = jnp.pad(fp_, ((0, min_rows - n_rows), (0, 0)))
            n_rows = min_rows

        # Generation-aware VMEM budgeting (v7x: 64 MiB/TC, v5e/v6e: 128 MiB).
        try:
            vmem_cap = int(pltpu.get_tpu_info().vmem_capacity_bytes)
        except Exception:
            vmem_cap = 64 << 20            # conservative fallback
        base_tile = self.frame_tile
        if vmem_cap >= (96 << 20):
            base_tile *= 2                 # v5e/v6e: larger tiles amortize step overhead
        shrink_at = min(40 << 20, int(0.60 * vmem_cap))

        tn = base_tile
        while tn > 64 and self._step_bytes(tn) > shrink_at:
            tn //= 2
        tn = min(tn, max(min_rows, (n_rows // 16) * 16))
        tn = max(min_rows, (tn // 16) * 16)
        # Megacore: keep >= 2 blocks on the parallel axis when there is work.
        while pl.cdiv(n_rows, tn) < 2 and tn > min_rows:
            tn = max(min_rows, ((tn // 2) // 16) * 16)
        n_blocks = pl.cdiv(n_rows, tn)

        vmem_limit = int(min(max(2 * self._step_bytes(tn), 24 << 20),
                             min(56 << 20, int(0.70 * vmem_cap))))

        # Final weights and mean denominators folded into kernel constants.
        n_elems = n_total * self.n_freq
        c_mag = (1.0 - self.w) / n_elems           # mean over |S| grid
        c_cplx = self.w / (2.0 * n_elems)          # mean over view_as_real (2x)

        kernel = functools.partial(
            _spec_loss_kernel,
            tn=tn, n_valid=n_total, fold=self.fp_pad // 128,
            c_mag=c_mag, c_cplx=c_cplx,
            need_mask=(n_blocks * tn != n_total))

        two_fp = 2 * self.fp_pad
        partials = pl.pallas_call(
            kernel,
            out_shape=jax.ShapeDtypeStruct((n_blocks, 8, 128), jnp.float32),
            grid_spec=pltpu.PrefetchScalarGridSpec(
                num_scalar_prefetch=0,
                grid=(n_blocks,),
                in_specs=[
                    pl.BlockSpec((tn, w), lambda i: (i, 0)),
                    pl.BlockSpec((tn, w), lambda i: (i, 0)),
                    pl.BlockSpec((w, two_fp), lambda i: (0, 0)),
                ],
                out_specs=pl.BlockSpec((1, 8, 128), lambda i: (i, 0, 0)),
            ),
            compiler_params=pltpu.CompilerParams(
                dimension_semantics=("parallel",),
                vmem_limit_bytes=vmem_limit,
            ),
        )(ft, fp_, self.basis)

        # Tiny deferred reduction (per-block 128-lane partials) in f32.
        return jnp.sum(partials[:, 0, :])


if __name__ == "__main__":
    winlen = 64
    fs = 16000
    loss_mod = ComplexCompressedSpecMSE(
        winlen=winlen, fs=fs, f_fade_low=300, f_fade_high=400,
        lf_complex_loss_weight=0.3)

    # Small deterministic inputs: batch=2, T=1040 -> 31 frames/signal,
    # 62 total frames (exercises the partial last block + in-kernel row mask).
    key = jax.random.PRNGKey(0)
    k1, k2 = jax.random.split(key)
    B, T = 2, 1040
    y_true = jax.random.normal(k1, (B, T), dtype=jnp.float32)
    y_pred = y_true + 0.1 * jax.random.normal(k2, (B, T), dtype=jnp.float32)

    loss = loss_mod(y_true, y_pred)
    jax.block_until_ready(loss)
    assert jnp.isfinite(loss), "loss is not finite"
    print("KERNEL_OK")
</pallas_src>

<mosaic_0001>
module attributes {stable_mosaic.version = 11 : i64} {
  func.func @_spec_loss_kernel(%arg0: i32, %arg1: memref<48x64xbf16, #tpu.memory_space<vmem>>, %arg2: memref<48x64xbf16, #tpu.memory_space<vmem>>, %arg3: memref<64x256xbf16, #tpu.memory_space<vmem>>, %arg4: memref<1x8x128xf32, #tpu.memory_space<vmem>>) attributes {dimension_semantics = [#tpu.dimension_semantics<parallel>], iteration_bounds = array<i64: 2>, scalar_prefetch = 0 : i64, scratch_operands = 0 : i64, tpu.core_type = #tpu.core_type<tc>, window_params = [{transform_indices = @transform_0, window_bounds = array<i64: 48, 64>}, {transform_indices = @transform_1, window_bounds = array<i64: 48, 64>}, {pipeline_mode = #tpu.pipeline_mode<synchronous>, transform_indices = @transform_2, window_bounds = array<i64: 64, 256>}, {transform_indices = @transform_3, window_bounds = array<i64: 1, 8, 128>}]} {
    %c0 = arith.constant 0 : index
    %c0_0 = arith.constant 0 : index
    %0 = vector.load %arg1[%c0, %c0_0] : memref<48x64xbf16, #tpu.memory_space<vmem>>, vector<48x64xbf16>
    %c0_1 = arith.constant 0 : index
    %c0_2 = arith.constant 0 : index
    %1 = vector.load %arg2[%c0_1, %c0_2] : memref<48x64xbf16, #tpu.memory_space<vmem>>, vector<48x64xbf16>
    %c48_i32 = arith.constant 48 : i32
    %2 = arith.muli %arg0, %c48_i32 : i32
    %3 = tpu.iota {dimensions = array<i32: 0>} : vector<48x1xi32>
    %4 = vector.broadcast %2 : i32 to vector<48x1xi32>
    %5 = arith.addi %3, %4 : vector<48x1xi32>
    %c62_i32 = arith.constant 62 : i32
    %6 = vector.broadcast %c62_i32 : i32 to vector<48x1xi32>
    %7 = arith.cmpi slt, %5, %6 : vector<48x1xi32>
    %cst = arith.constant 0.000000e+00 : bf16
    %8 = vector.shape_cast %7 : vector<48x1xi1> to vector<48x1xi1>
    %9 = vector.broadcast %8 : vector<48x1xi1> to vector<48x64xi1>
    %10 = vector.broadcast %cst : bf16 to vector<48x64xbf16>
    %11 = arith.select %9, %0, %10 : vector<48x64xi1>, vector<48x64xbf16>
    %cst_3 = arith.constant 0.000000e+00 : bf16
    %12 = vector.shape_cast %7 : vector<48x1xi1> to vector<48x1xi1>
    %13 = vector.broadcast %12 : vector<48x1xi1> to vector<48x64xi1>
    %14 = vector.broadcast %cst_3 : bf16 to vector<48x64xbf16>
    %15 = arith.select %13, %1, %14 : vector<48x64xi1>, vector<48x64xbf16>
    %c0_4 = arith.constant 0 : index
    %c0_5 = arith.constant 0 : index
    %16 = vector.load %arg3[%c0_4, %c0_5] : memref<64x256xbf16, #tpu.memory_space<vmem>>, vector<64x256xbf16>
    %cst_6 = arith.constant dense<0.000000e+00> : vector<48x256xf32>
    %17 = tpu.matmul %11, %16, %cst_6 {dimension_numbers = #tpu.dot_dimension_numbers<[1], [0], [0], [1], [0, 0, 1, 1], [], []>} : vector<48x64xbf16>, vector<64x256xbf16>, vector<48x256xf32> -> vector<48x256xf32>
    %cst_7 = arith.constant dense<0.000000e+00> : vector<48x256xf32>
    %18 = tpu.matmul %15, %16, %cst_7 {dimension_numbers = #tpu.dot_dimension_numbers<[1], [0], [0], [1], [0, 0, 1, 1], [], []>} : vector<48x64xbf16>, vector<64x256xbf16>, vector<48x256xf32> -> vector<48x256xf32>
    %19 = vector.extract_strided_slice %17 {offsets = [0, 0], sizes = [48, 128], strides = [1, 1]} : vector<48x256xf32> to vector<48x128xf32>
    %20 = vector.extract_strided_slice %17 {offsets = [0, 128], sizes = [48, 128], strides = [1, 1]} : vector<48x256xf32> to vector<48x128xf32>
    %21 = vector.extract_strided_slice %18 {offsets = [0, 0], sizes = [48, 128], strides = [1, 1]} : vector<48x256xf32> to vector<48x128xf32>
    %22 = vector.extract_strided_slice %18 {offsets = [0, 128], sizes = [48, 128], strides = [1, 1]} : vector<48x256xf32> to vector<48x128xf32>
    %23 = arith.mulf %19, %19 : vector<48x128xf32>
    %24 = arith.mulf %20, %20 : vector<48x128xf32>
    %25 = arith.addf %23, %24 : vector<48x128xf32>
    %cst_8 = arith.constant 1.000000e-24 : f32
    %26 = vector.broadcast %cst_8 : f32 to vector<48x128xf32>
    %27 = arith.maximumf %25, %26 : vector<48x128xf32>
    %28 = arith.mulf %21, %21 : vector<48x128xf32>
    %29 = arith.mulf %22, %22 : vector<48x128xf32>
    %30 = arith.addf %28, %29 : vector<48x128xf32>
    %cst_9 = arith.constant 1.000000e-24 : f32
    %31 = vector.broadcast %cst_9 : f32 to vector<48x128xf32>
    %32 = arith.maximumf %30, %31 : vector<48x128xf32>
    %33 = math.log %27 : vector<48x128xf32>
    %34 = math.log %32 : vector<48x128xf32>
    %cst_10 = arith.constant 1.500000e-01 : f32
    %35 = vector.broadcast %cst_10 : f32 to vector<48x128xf32>
    %36 = arith.mulf %35, %33 : vector<48x128xf32>
    %37 = math.exp %36 : vector<48x128xf32>
    %cst_11 = arith.constant 1.500000e-01 : f32
    %38 = vector.broadcast %cst_11 : f32 to vector<48x128xf32>
    %39 = arith.mulf %38, %34 : vector<48x128xf32>
    %40 = math.exp %39 : vector<48x128xf32>
    %cst_12 = arith.constant -3.500000e-01 : f32
    %41 = vector.broadcast %cst_12 : f32 to vector<48x128xf32>
    %42 = arith.mulf %41, %33 : vector<48x128xf32>
    %43 = math.exp %42 : vector<48x128xf32>
    %cst_13 = arith.constant -3.500000e-01 : f32
    %44 = vector.broadcast %cst_13 : f32 to vector<48x128xf32>
    %45 = arith.mulf %44, %34 : vector<48x128xf32>
    %46 = math.exp %45 : vector<48x128xf32>
    %47 = arith.subf %40, %37 : vector<48x128xf32>
    %48 = arith.mulf %21, %46 : vector<48x128xf32>
    %49 = arith.mulf %19, %43 : vector<48x128xf32>
    %50 = arith.subf %48, %49 : vector<48x128xf32>
    %51 = arith.mulf %22, %46 : vector<48x128xf32>
    %52 = arith.mulf %20, %43 : vector<48x128xf32>
    %53 = arith.subf %51, %52 : vector<48x128xf32>
    %54 = arith.mulf %47, %47 : vector<48x128xf32>
    %cst_14 = arith.constant 3.42130981E-4 : f32
    %55 = vector.broadcast %cst_14 : f32 to vector<48x128xf32>
    %56 = arith.mulf %55, %54 : vector<48x128xf32>
    %57 = arith.mulf %50, %50 : vector<48x128xf32>
    %58 = arith.mulf %53, %53 : vector<48x128xf32>
    %59 = arith.addf %57, %58 : vector<48x128xf32>
    %cst_15 = arith.constant 7.33137858E-5 : f32
    %60 = vector.broadcast %cst_15 : f32 to vector<48x128xf32>
    %61 = arith.mulf %60, %59 : vector<48x128xf32>
    %62 = arith.addf %56, %61 : vector<48x128xf32>
    %cst_16 = arith.constant dense<0.000000e+00> : vector<128xf32>
    %63 = vector.multi_reduction <add>, %62, %cst_16 [0] : vector<48x128xf32> to vector<128xf32>
    %64 = vector.shape_cast %63 : vector<128xf32> to vector<1x128xf32>
    %65 = vector.shape_cast %64 : vector<1x128xf32> to vector<1x1x128xf32>
    %66 = vector.shape_cast %65 : vector<1x1x128xf32> to vector<1x1x128xf32>
    %67 = vector.broadcast %66 : vector<1x1x128xf32> to vector<1x8x128xf32>
    %c0_17 = arith.constant 0 : index
    %c0_18 = arith.constant 0 : index
    %c0_19 = arith.constant 0 : index
    %68 = vector.load %arg4[%c0_17, %c0_18, %c0_19] : memref<1x8x128xf32, #tpu.memory_space<vmem>>, vector<1x8x128xf32>
    tpu.vector_store %arg4[%c0_17, %c0_18, %c0_19], %67 {strides = array<i32>} : memref<1x8x128xf32, #tpu.memory_space<vmem>>, vector<1x8x128xf32>,
    return
  }
  func.func @transform_0(%arg0: i32) -> (i32, i32) {
    %c0_i32 = arith.constant 0 : i32
    %c0_i32_0 = arith.constant 0 : i32
    return %arg0, %c0_i32 : i32, i32
  }
  func.func @transform_1(%arg0: i32) -> (i32, i32) {
    %c0_i32 = arith.constant 0 : i32
    %c0_i32_0 = arith.constant 0 : i32
    return %arg0, %c0_i32 : i32, i32
  }
  func.func @transform_2(%arg0: i32) -> (i32, i32) {
    %c0_i32 = arith.constant 0 : i32
    %c0_i32_0 = arith.constant 0 : i32
    %c0_i32_1 = arith.constant 0 : i32
    return %c0_i32, %c0_i32_0 : i32, i32
  }
  func.func @transform_3(%arg0: i32) -> (i32, i32, i32) {
    %c0_i32 = arith.constant 0 : i32
    %c0_i32_0 = arith.constant 0 : i32
    %c0_i32_1 = arith.constant 0 : i32
    return %arg0, %c0_i32, %c0_i32_0 : i32, i32, i32
  }
}

</mosaic_0001>

<llo_original>
// kernel: a_call__.1
$region0: #{a_call__.1}
  #allocation0 [shape = 'u32[]', space=smem, size = 0x4, offset = 0x4, fixed_abs, tag = 'smem constant byte address 0x4 - core index']
  #allocation1 [shape = 'u32[72,128]{1,0:T(1,128)}', space=vmem, size = 0x9000, scoped, tag = 'internal scratch']
  %s0 = inlined_call_operand.vmem [shape: bf16[62,64], index: 0, kind: input, shape index: {}]
  %s1 = inlined_call_operand.vmem [shape: bf16[62,64], index: 1, kind: input, shape index: {}]
  %s2 = inlined_call_operand.vmem [shape: bf16[64,256], index: 2, kind: input, shape index: {}]
  %s3 = inlined_call_operand.vmem [shape: f32[2,8,128], index: 3, kind: output, shape index: {}]
  %s4 = sld [smem:[#allocation0]]
  $region45: #{a_call__.1} parent=0
    _
  %s6 = ssub.s32 1, %s4
  %s7 = scalar_select 0, %s6, %s4
  loop: start=0, step=1, limit=4
  $region2: #{a_call__.1} parent=0 // loop_pre_header
    _
  $region3: #{a_call__.1} parent=0 // loop_header
    %s9 = sphi 0, %s13
    %p10 = scmp.ge.s32.totalorder %s9, 4
    %s19 = sphi 0, %s21
    %s22 = sphi 0, %s19
    %s23 = sphi 0, %s22
    %s39 = sphi 0, %s23
    %s45 = sphi 0, %s47
    %s48 = sphi 0, %s45
    %s49 = sphi 0, %s48
    %s65 = sphi 0, %s49
    %s69 = sphi 0, %s69
    %s71 = sphi 0, %s69
    %s72 = sphi 0, %s71
    %s86 = sphi 0, %s72
    %s92 = sphi 0, %s94
    %s95 = sphi 0, %s92
    %s96 = sphi 0, %s95
    %s112 = sphi 0, %s96
  $region4: #{a_call__.1} parent=0 // loop_header_branch
    %12 = sbr.rel (%p10) target = $region8
  $region5: #{a_call__.1} parent=0 // loop_body
    %s14 = ssub.s32 %s9, 1
    %s15 = ssub.s32 %s9, 2
    %s16 = sadd.s32 %s9, 1
    %s17 = ssub.s32 %s9, %s16
    %p18 = scmp.eq.s32.totalorder %s17, 0
    %s20 = sadd.s32 %s19, 1
    %s21 = scalar_select %p18, %s19, %s20
    %p24 = pneg %p18
    %p25 = scmp.eq.s32.totalorder %s9, 1
    %p26 = por %p24, %p25
    %p27 = scmp.ne.s32.totalorder %s19, %s22
    %p28 = scmp.eq.s32.totalorder %s9, 0
    %p29 = por %p27, %p28
    %p30 = scmp.ne.s32.totalorder %s19, %s22
    %p31 = scmp.eq.s32.totalorder %s14, 1
    %p32 = por %p30, %p31
    %p33 = scmp.ne.s32.totalorder %s22, %s23
    %p34 = scmp.eq.s32.totalorder %s14, 0
    %p35 = por %p33, %p34
    %p36 = scmp.ne.s32.totalorder %s22, %s23
    %p37 = scmp.eq.s32.totalorder %s15, 1
    %p38 = por %p36, %p37
    %p40 = scmp.ne.s32.totalorder %s23, %s39
    %p41 = scmp.eq.s32.totalorder %s15, 0
    %p42 = por %p40, %p41
    %s43 = ssub.s32 %s9, %s16
    %p44 = scmp.eq.s32.totalorder %s43, 0
    %s46 = sadd.s32 %s45, 1
    %s47 = scalar_select %p44, %s45, %s46
    %p50 = pneg %p44
    %p51 = scmp.eq.s32.totalorder %s9, 1
    %p52 = por %p50, %p51
    %p53 = scmp.ne.s32.totalorder %s45, %s48
    %p54 = scmp.eq.s32.totalorder %s9, 0
    %p55 = por %p53, %p54
    %p56 = scmp.ne.s32.totalorder %s45, %s48
    %p57 = scmp.eq.s32.totalorder %s14, 1
    %p58 = por %p56, %p57
    %p59 = scmp.ne.s32.totalorder %s48, %s49
    %p60 = scmp.eq.s32.totalorder %s14, 0
    %p61 = por %p59, %p60
    %p62 = scmp.ne.s32.totalorder %s48, %s49
    %p63 = scmp.eq.s32.totalorder %s15, 1
    %p64 = por %p62, %p63
    %p66 = scmp.ne.s32.totalorder %s49, %s65
    %p67 = scmp.eq.s32.totalorder %s15, 0
    %p68 = por %p66, %p67
    %s70 = sadd.s32 %s69, 1
    %p73 = scmp.eq.s32.totalorder %s9, 1
    %p74 = scmp.ne.s32.totalorder %s69, %s71
    %p75 = scmp.eq.s32.totalorder %s9, 0
    %p76 = por %p74, %p75
    %p77 = scmp.ne.s32.totalorder %s69, %s71
    %p78 = scmp.eq.s32.totalorder %s14, 1
    %p79 = por %p77, %p78
    %p80 = scmp.ne.s32.totalorder %s71, %s72
    %p81 = scmp.eq.s32.totalorder %s14, 0
    %p82 = por %p80, %p81
    %p83 = scmp.ne.s32.totalorder %s71, %s72
    %p84 = scmp.eq.s32.totalorder %s15, 1
    %p85 = por %p83, %p84
    %p87 = scmp.ne.s32.totalorder %s72, %s86
    %p88 = scmp.eq.s32.totalorder %s15, 0
    %p89 = por %p87, %p88
    %s90 = ssub.s32 %s9, %s16
    %p91 = scmp.eq.s32.totalorder %s90, 0
    %s93 = sadd.s32 %s92, 1
    %s94 = scalar_select %p91, %s92, %s93
    %p97 = pneg %p91
    %p98 = scmp.eq.s32.totalorder %s9, 1
    %p99 = por %p97, %p98
    %p100 = scmp.ne.s32.totalorder %s92, %s95
    %p101 = scmp.eq.s32.totalorder %s9, 0
    %p102 = por %p100, %p101
    %p103 = scmp.ne.s32.totalorder %s92, %s95
    %p104 = scmp.eq.s32.totalorder %s14, 1
    %p105 = por %p103, %p104
    %p106 = scmp.ne.s32.totalorder %s95, %s96
    %p107 = scmp.eq.s32.totalorder %s14, 0
    %p108 = por %p106, %p107
    %p109 = scmp.ne.s32.totalorder %s95, %s96
    %p110 = scmp.eq.s32.totalorder %s15, 1
    %p111 = por %p109, %p110
    %p113 = scmp.ne.s32.totalorder %s96, %s112
    %p114 = scmp.eq.s32.totalorder %s15, 0
    %p115 = por %p113, %p114
    %p116 = scmp.le.s32.totalorder 1, %s9
    %p117 = scmp.lt.s32.totalorder %s9, 3
    %p118 = pnand %p116, %p117
    %p119 = pneg %p118
    // Predicated region
    $region9: #{a_call__.1} parent=5 // pred_check
      _
    $region10: #{a_call__.1} parent=5 // pred_check_branch
      %121 = sbr.rel (%p118) target = $region12
    $region11: #{a_call__.1} parent=5 // pred_region
      %s122 = ssub.s32 %s9, 1
      // Predicated region
      $region13: #{a_call__.1} parent=11 // pred_check
        %p123 = pneg %p82
      $region14: #{a_call__.1} parent=11 // pred_check_branch
        %125 = sbr.rel (%p123) target = $region16
      $region15: #{a_call__.1} parent=11 // pred_region
        _
      $region16: #{a_call__.1} parent=11 // pred_fallthru
        _
    $region12: #{a_call__.1} parent=5 // pred_fallthru
      _
    %p126 = scmp.lt.s32.totalorder %s9, 2
    // Predicated region
    $region17: #{a_call__.1} parent=5 // pred_check
      %p127 = pneg %p126
    $region18: #{a_call__.1} parent=5 // pred_check_branch
      %129 = sbr.rel (%p127) target = $region20
    $region19: #{a_call__.1} parent=5 // pred_region
      // Predicated region
      $region21: #{a_call__.1} parent=19 // pred_check
        %p130 = pneg %p29
      $region22: #{a_call__.1} parent=19 // pred_check_branch
        %132 = sbr.rel (%p130) target = $region24
      $region23: #{a_call__.1} parent=19 // pred_region
        %s133 = smul.u32 6, %s9
        %s134 = ssub.s32 8, %s133
        %p135 = scmp.lt.s32.totalorder %s134, 6
        %s136 = scalar_select %p135, %s134, 6
        %s137 = smul.u32 4, %s136
        %p138 = scmp.lt.s32.totalorder %s133, 7
        %s139 = scalar_select %p138, %s133, 7
        %s140 = smul.addr %s139, 4
        %s141 = scalar_lea.vmem %s0, %s140
        %s142 = smul.u32 6, %s9
        %s143 = ssub.s32 8, %s142
        %p144 = scmp.lt.s32.totalorder %s143, 6
        %s145 = scalar_select %p144, %s143, 6
        %s146 = smul.u32 4, %s145
      $region24: #{a_call__.1} parent=19 // pred_fallthru
        _
      // Predicated region
      $region25: #{a_call__.1} parent=19 // pred_check
        %p147 = pneg %p55
      $region26: #{a_call__.1} parent=19 // pred_check_branch
        %149 = sbr.rel (%p147) target = $region28
      $region27: #{a_call__.1} parent=19 // pred_region
        %s150 = smul.u32 6, %s9
        %s151 = ssub.s32 8, %s150
        %p152 = scmp.lt.s32.totalorder %s151, 6
        %s153 = scalar_select %p152, %s151, 6
        %s154 = smul.u32 4, %s153
        %p155 = scmp.lt.s32.totalorder %s150, 7
        %s156 = scalar_select %p155, %s150, 7
        %s157 = smul.addr %s156, 4
        %s158 = scalar_lea.vmem %s1, %s157
        %s159 = smul.u32 6, %s9
        %s160 = ssub.s32 8, %s159
        %p161 = scmp.lt.s32.totalorder %s160, 6
        %s162 = scalar_select %p161, %s160, 6
        %s163 = smul.u32 4, %s162
      $region28: #{a_call__.1} parent=19 // pred_fallthru
        _
    $region20: #{a_call__.1} parent=5 // pred_fallthru
      _
    %p164 = scmp.le.s32.totalorder 1, %s9
    %p165 = scmp.lt.s32.totalorder %s9, 3
    %p166 = pnand %p164, %p165
    %p167 = pneg %p166
    // Predicated region
    $region29: #{a_call__.1} parent=5 // pred_check
      _
    $region30: #{a_call__.1} parent=5 // pred_check_branch
      %169 = sbr.rel (%p166) target = $region32
    $region31: #{a_call__.1} parent=5 // pred_region
      %s170 = ssub.s32 %s9, 1
      %s171 = smul.u32 6, %s14
      %s172 = ssub.s32 8, %s171
      %p173 = scmp.lt.s32.totalorder %s172, 6
      %s174 = scalar_select %p173, %s172, 6
      %s175 = smul.u32 4, %s174
      %p176 = scmp.lt.s32.totalorder %s171, 7
      %s177 = scalar_select %p176, %s171, 7
      %s178 = smul.addr %s177, 4
      %s179 = scalar_lea.vmem %s0, %s178
      %p180 = pneg %p35
      %p181 = pneg %p32
      %s182 = smul.u32 6, %s14
      %s183 = ssub.s32 8, %s182
      %p184 = scmp.lt.s32.totalorder %s183, 6
      %s185 = scalar_select %p184, %s183, 6
      %s186 = smul.u32 4, %s185
      %p187 = scmp.lt.s32.totalorder %s182, 7
      %s188 = scalar_select %p187, %s182, 7
      %s189 = smul.addr %s188, 4
      %s190 = scalar_lea.vmem %s1, %s189
      %p191 = pneg %p61
      %p192 = pneg %p58
      %p193 = pneg %p82
      %p194 = pneg %p79
      %p195 = pneg %p108
      %p196 = pneg %p105
      %p197 = scmp.lt.s32.totalorder %s14, 1
      %s198 = scalar_select %p197, %s14, 1
      %s199 = smul.addr %s198, 8
      %s200 = scalar_lea.vmem %s3, %s199
      %s201 = smul.u32 6, %s14
      %s202 = ssub.s32 8, %s201
      %p203 = scmp.lt.s32.totalorder %s202, 6
      %s204 = scalar_select %p203, %s202, 6
      %s205 = smul.u32 4, %s204
      %p206 = scmp.lt.s32.totalorder %s201, 7
      %s207 = scalar_select %p206, %s201, 7
      %s208 = smul.addr %s207, 4
      %s209 = scalar_lea.vmem %s0, %s208
      %s210 = smul.u32 6, %s14
      %s211 = ssub.s32 8, %s210
      %p212 = scmp.lt.s32.totalorder %s211, 6
      %s213 = scalar_select %p212, %s211, 6
      %s214 = smul.u32 4, %s213
      %s215 = smul.u32 6, %s14
      %s216 = ssub.s32 8, %s215
      %p217 = scmp.lt.s32.totalorder %s216, 6
      %s218 = scalar_select %p217, %s216, 6
      %s219 = smul.u32 4, %s218
      %p220 = scmp.lt.s32.totalorder %s215, 7
      %s221 = scalar_select %p220, %s215, 7
      %s222 = smul.addr %s221, 4
      %s223 = scalar_lea.vmem %s1, %s222
      %s224 = smul.u32 6, %s14
      %s225 = ssub.s32 8, %s224
      %p226 = scmp.lt.s32.totalorder %s225, 6
      %s227 = scalar_select %p226, %s225, 6
      %s228 = smul.u32 4, %s227
      %p229 = scmp.lt.s32.totalorder %s14, 1
      %s230 = scalar_select %p229, %s14, 1
      %s231 = smul.addr %s230, 8
      %s232 = scalar_lea.vmem %s3, %s231
      %v234 = vld [vmem:[%s209] sm:$0xf]
      %v235 = vld [vmem:[%s209 + $0x4] sm:$0xf]
      %v236 = vld [vmem:[%s209 + $0x8] sm:$0xf]
      %v237 = vld [vmem:[%s209 + $0xc] sm:$0xf]
      %v238 = vld [vmem:[%s209 + $0x10] sm:$0xf]
      %v239 = vld [vmem:[%s209 + $0x14] sm:$0xf]
      %v240 = vld [vmem:[%s223] sm:$0xf]
      %v241 = vld [vmem:[%s223 + $0x4] sm:$0xf]
      %v242 = vld [vmem:[%s223 + $0x8] sm:$0xf]
      %v243 = vld [vmem:[%s223 + $0xc] sm:$0xf]
      %v244 = vld [vmem:[%s223 + $0x10] sm:$0xf]
      %v245 = vld [vmem:[%s223 + $0x14] sm:$0xf]
      %s246 = smul.u32 %s14, 48
      %v247 = vlaneseq
      %v248 = vshrl.u32 %v247, 7
      %v249 = vadd.s32 %v248, 8
      %v250 = vadd.s32 %v248, 16
      %v251 = vadd.s32 %v248, 24
      %v252 = vadd.s32 %v248, 32
      %v253 = vadd.s32 %v248, 40
      %v254 = vstv %s246
      %v255 = vadd.s32 %v248, %v254
      %v256 = vadd.s32 %v249, %v254
      %v257 = vadd.s32 %v250, %v254
      %v258 = vadd.s32 %v251, %v254
      %v259 = vadd.s32 %v252, %v254
      %v260 = vadd.s32 %v253, %v254
      %vm261 = vcmp.lt.s32.totalorder %v255, 62
      %vm262 = vcmp.lt.s32.totalorder %v256, 62
      %vm263 = vcmp.lt.s32.totalorder %v257, 62
      %vm264 = vcmp.lt.s32.totalorder %v258, 62
      %vm265 = vcmp.lt.s32.totalorder %v259, 62
      %vm266 = vcmp.lt.s32.totalorder %v260, 62
      %v267 = vsel %vm261, 1, 0
      %v268 = vsel %vm262, 1, 0
      %v269 = vsel %vm263, 1, 0
      %v270 = vsel %vm264, 1, 0
      %v271 = vsel %vm265, 1, 0
      %v272 = vsel %vm266, 1, 0
      %vm273 = vcmp.eq.s32.totalorder %v267, 1
      %vm274 = vcmp.eq.s32.totalorder %v268, 1
      %vm275 = vcmp.eq.s32.totalorder %v269, 1
      %vm276 = vcmp.eq.s32.totalorder %v270, 1
      %vm277 = vcmp.eq.s32.totalorder %v271, 1
      %vm278 = vcmp.eq.s32.totalorder %v272, 1
      %vm279 = vmpackc.low %vm273, %vm273
      %vm280 = vmpackc.low %vm274, %vm274
      %vm281 = vmpackc.low %vm275, %vm275
      %vm282 = vmpackc.low %vm276, %vm276
      %vm283 = vmpackc.low %vm277, %vm277
      %vm284 = vmpackc.low %vm278, %vm278
      %v285 = vsel %vm279, %v234, 0
      %v286 = vsel %vm280, %v235, 0
      %v287 = vsel %vm281, %v236, 0
      %v288 = vsel %vm282, %v237, 0
      %v289 = vsel %vm283, %v238, 0
      %v290 = vsel %vm284, %v239, 0
      %v291 = vsel %vm279, %v240, 0
      %v292 = vsel %vm280, %v241, 0
      %v293 = vsel %vm281, %v242, 0
      %v294 = vsel %vm282, %v243, 0
      %v295 = vsel %vm283, %v244, 0
      %v296 = vsel %vm284, %v245, 0
      %v297 = vld [vmem:[%s2] sm:$0xff]
      %v298 = vld [vmem:[%s2 + $0x8] sm:$0xff]
      %v299 = vld [vmem:[%s2 + $0x10] sm:$0xff]
      %v300 = vld [vmem:[%s2 + $0x18] sm:$0xff]
      %v301 = vld [vmem:[%s2 + $0x20] sm:$0xff]
      %v302 = vld [vmem:[%s2 + $0x28] sm:$0xff]
      %v303 = vld [vmem:[%s2 + $0x30] sm:$0xff]
      %v304 = vld [vmem:[%s2 + $0x38] sm:$0xff]
      %v311 = vunpack.c.l.b16 %v285
      %v312 = vunpack.c.l.b16 %v286
      %v313 = vunpack.c.l.b16 %v287
      %v314 = vunpack.c.l.b16 %v288
      %v315 = vunpack.c.l.b16 %v289
      %v316 = vunpack.c.l.b16 %v290
      %v317 = vpack.c.b16 %v312, %v311
      %v318 = vpack.c.b16 %v314, %v313
      %v319 = vpack.c.b16 %v316, %v315
      %v328 = vunpack.c.l.b16 %v297
      %v329 = vunpack.c.h.b16 %v297
      %v330 = vunpack.c.l.b16 %v298
      %v331 = vunpack.c.h.b16 %v298
      %v332 = vunpack.c.l.b16 %v299
      %v333 = vunpack.c.h.b16 %v299
      %v334 = vunpack.c.l.b16 %v300
      %v335 = vunpack.c.h.b16 %v300
      %v336 = vunpack.c.l.b16 %v301
      %v337 = vunpack.c.h.b16 %v301
      %v338 = vunpack.c.l.b16 %v302
      %v339 = vunpack.c.h.b16 %v302
      %v340 = vunpack.c.l.b16 %v303
      %v341 = vunpack.c.h.b16 %v303
      %v342 = vunpack.c.l.b16 %v304
      %v343 = vunpack.c.h.b16 %v304
      %v344 = vpack.c.b16 %v330, %v328
      %v345 = vpack.c.b16 %v331, %v329
      %v346 = vpack.c.b16 %v334, %v332
      %v347 = vpack.c.b16 %v335, %v333
      %v348 = vpack.c.b16 %v338, %v336
      %v349 = vpack.c.b16 %v339, %v337
      %v350 = vpack.c.b16 %v342, %v340
      %v351 = vpack.c.b16 %v343, %v341
      %vm360 = vcmask 523264
      %v362 = vsel %vm360, %v317, 0
      %v365 = vsel %vm360, %v318, 0
      %v368 = vsel %vm360, %v319, 0
      %370 = vmatpush.bf16.msra.mxu0 0
      %371 = vmatpush.bf16.msra.mxu0 0
      %372 = vmatpush.bf16.msra.mxu0 0
      %373 = vmatpush.bf16.msra.mxu0 0
      %374 = vmatpush.bf16.msra.mxu0 %v350
      %375 = vmatpush.bf16.msra.mxu0 %v348
      %376 = vmatpush.bf16.msra.mxu0 %v346
      %377 = vmatpush.bf16.msra.mxu0 %v344
      %378 = vmatmul.bf16.gmra.mxu0 %v362
      %v379 = vpop.f32.mrf.mxu0
      %v380 = vadd.f32 0.0, %v379
      %v381 = vpop.f32.mrf.mxu0
      %v382 = vadd.f32 0.0, %v381
      %383 = vmatmul.bf16.gmra.mxu0 %v365
      %v384 = vpop.f32.mrf.mxu0
      %v385 = vadd.f32 0.0, %v384
      %v386 = vpop.f32.mrf.mxu0
      %v387 = vadd.f32 0.0, %v386
      %388 = vmatmul.bf16.gmra.mxu0 %v368
      %v389 = vpop.f32.mrf.mxu0
      %v390 = vadd.f32 0.0, %v389
      %v391 = vpop.f32.mrf.mxu0
      %v392 = vadd.f32 0.0, %v391
      %393 = vdwg.mxu0
      %394 = vmatpush.bf16.msra.mxu0 0
      %395 = vmatpush.bf16.msra.mxu0 0
      %396 = vmatpush.bf16.msra.mxu0 0
      %397 = vmatpush.bf16.msra.mxu0 0
      %398 = vmatpush.bf16.msra.mxu0 %v351
      %399 = vmatpush.bf16.msra.mxu0 %v349
      %400 = vmatpush.bf16.msra.mxu0 %v347
      %401 = vmatpush.bf16.msra.mxu0 %v345
      %402 = vmatmul.bf16.gmra.mxu0 %v362
      %v403 = vpop.f32.mrf.mxu0
      %v404 = vadd.f32 0.0, %v403
      %v405 = vpop.f32.mrf.mxu0
      %v406 = vadd.f32 0.0, %v405
      %407 = vmatmul.bf16.gmra.mxu0 %v365
      %v408 = vpop.f32.mrf.mxu0
      %v409 = vadd.f32 0.0, %v408
      %v410 = vpop.f32.mrf.mxu0
      %v411 = vadd.f32 0.0, %v410
      %412 = vmatmul.bf16.gmra.mxu0 %v368
      %v413 = vpop.f32.mrf.mxu0
      %v414 = vadd.f32 0.0, %v413
      %v415 = vpop.f32.mrf.mxu0
      %v416 = vadd.f32 0.0, %v415
      %417 = vdwg.mxu0
      %v424 = vunpack.c.l.b16 %v291
      %v425 = vunpack.c.l.b16 %v292
      %v426 = vunpack.c.l.b16 %v293
      %v427 = vunpack.c.l.b16 %v294
      %v428 = vunpack.c.l.b16 %v295
      %v429 = vunpack.c.l.b16 %v296
      %v430 = vpack.c.b16 %v425, %v424
      %v431 = vpack.c.b16 %v427, %v426
      %v432 = vpack.c.b16 %v429, %v428
      %v434 = vsel %vm360, %v430, 0
      %v437 = vsel %vm360, %v431, 0
      %v440 = vsel %vm360, %v432, 0
      %442 = vmatpush.bf16.msra.mxu0 0
      %443 = vmatpush.bf16.msra.mxu0 0
      %444 = vmatpush.bf16.msra.mxu0 0
      %445 = vmatpush.bf16.msra.mxu0 0
      %446 = vmatpush.bf16.msra.mxu0 %v350
      %447 = vmatpush.bf16.msra.mxu0 %v348
      %448 = vmatpush.bf16.msra.mxu0 %v346
      %449 = vmatpush.bf16.msra.mxu0 %v344
      %450 = vmatmul.bf16.gmra.mxu0 %v434
      %v451 = vpop.f32.mrf.mxu0
      %v452 = vadd.f32 0.0, %v451
      %v453 = vpop.f32.mrf.mxu0
      %v454 = vadd.f32 0.0, %v453
      %455 = vmatmul.bf16.gmra.mxu0 %v437
      %v456 = vpop.f32.mrf.mxu0
      %v457 = vadd.f32 0.0, %v456
      %v458 = vpop.f32.mrf.mxu0
      %v459 = vadd.f32 0.0, %v458
      %460 = vmatmul.bf16.gmra.mxu0 %v440
      %v461 = vpop.f32.mrf.mxu0
      %v462 = vadd.f32 0.0, %v461
      %v463 = vpop.f32.mrf.mxu0
      %v464 = vadd.f32 0.0, %v463
      %465 = vdwg.mxu0
      %466 = vmatpush.bf16.msra.mxu0 0
      %467 = vmatpush.bf16.msra.mxu0 0
      %468 = vmatpush.bf16.msra.mxu0 0
      %469 = vmatpush.bf16.msra.mxu0 0
      %470 = vmatpush.bf16.msra.mxu0 %v351
      %471 = vmatpush.bf16.msra.mxu0 %v349
      %472 = vmatpush.bf16.msra.mxu0 %v347
      %473 = vmatpush.bf16.msra.mxu0 %v345
      %474 = vmatmul.bf16.gmra.mxu0 %v434
      %v475 = vpop.f32.mrf.mxu0
      %v476 = vadd.f32 0.0, %v475
      %v477 = vpop.f32.mrf.mxu0
      %v478 = vadd.f32 0.0, %v477
      %479 = vmatmul.bf16.gmra.mxu0 %v437
      %v480 = vpop.f32.mrf.mxu0
      %v481 = vadd.f32 0.0, %v480
      %v482 = vpop.f32.mrf.mxu0
      %v483 = vadd.f32 0.0, %v482
      %484 = vmatmul.bf16.gmra.mxu0 %v440
      %v485 = vpop.f32.mrf.mxu0
      %v486 = vadd.f32 0.0, %v485
      %v487 = vpop.f32.mrf.mxu0
      %v488 = vadd.f32 0.0, %v487
      %489 = vdwg.mxu0
      %v490 = vmul.f32 %v380, %v380
      %v491 = vmul.f32 %v382, %v382
      %v492 = vmul.f32 %v385, %v385
      %v493 = vmul.f32 %v387, %v387
      %v494 = vmul.f32 %v390, %v390
      %v495 = vmul.f32 %v392, %v392
      %v496 = vmul.f32 %v404, %v404
      %v497 = vmul.f32 %v406, %v406
      %v498 = vmul.f32 %v409, %v409
      %v499 = vmul.f32 %v411, %v411
      %v500 = vmul.f32 %v414, %v414
      %v501 = vmul.f32 %v416, %v416
      %v502 = vadd.f32 %v490, %v496
      %v503 = vadd.f32 %v491, %v497
      %v504 = vadd.f32 %v492, %v498
      %v505 = vadd.f32 %v493, %v499
      %v506 = vadd.f32 %v494, %v500
      %v507 = vadd.f32 %v495, %v501
      %v508 = vmax.f32 %v502, 1e-24
      %v509 = vmax.f32 %v503, 1e-24
      %v510 = vmax.f32 %v504, 1e-24
      %v511 = vmax.f32 %v505, 1e-24
      %v512 = vmax.f32 %v506, 1e-24
      %v513 = vmax.f32 %v507, 1e-24
      %v514 = vmul.f32 %v452, %v452
      %v515 = vmul.f32 %v454, %v454
      %v516 = vmul.f32 %v457, %v457
      %v517 = vmul.f32 %v459, %v459
      %v518 = vmul.f32 %v462, %v462
      %v519 = vmul.f32 %v464, %v464
      %v520 = vmul.f32 %v476, %v476
      %v521 = vmul.f32 %v478, %v478
      %v522 = vmul.f32 %v481, %v481
      %v523 = vmul.f32 %v483, %v483
      %v524 = vmul.f32 %v486, %v486
      %v525 = vmul.f32 %v488, %v488
      %v526 = vadd.f32 %v514, %v520
      %v527 = vadd.f32 %v515, %v521
      %v528 = vadd.f32 %v516, %v522
      %v529 = vadd.f32 %v517, %v523
      %v530 = vadd.f32 %v518, %v524
      %v531 = vadd.f32 %v519, %v525
      %v532 = vmax.f32 %v526, 1e-24
      %v533 = vmax.f32 %v527, 1e-24
      %v534 = vmax.f32 %v528, 1e-24
      %v535 = vmax.f32 %v529, 1e-24
      %v536 = vmax.f32 %v530, 1e-24
      %v537 = vmax.f32 %v531, 1e-24
      %v538 = vlog2.pop %v508
      %v539 = vmul.f32 %v538, 0.6931472
      %v540 = vlog2.pop %v509
      %v541 = vmul.f32 %v540, 0.6931472
      %v542 = vlog2.pop %v510
      %v543 = vmul.f32 %v542, 0.6931472
      %v544 = vlog2.pop %v511
      %v545 = vmul.f32 %v544, 0.6931472
      %v546 = vlog2.pop %v512
      %v547 = vmul.f32 %v546, 0.6931472
      %v548 = vlog2.pop %v513
      %v549 = vmul.f32 %v548, 0.6931472
      %v550 = vlog2.pop %v532
      %v551 = vmul.f32 %v550, 0.6931472
      %v552 = vlog2.pop %v533
      %v553 = vmul.f32 %v552, 0.6931472
      %v554 = vlog2.pop %v534
      %v555 = vmul.f32 %v554, 0.6931472
      %v556 = vlog2.pop %v535
      %v557 = vmul.f32 %v556, 0.6931472
      %v558 = vlog2.pop %v536
      %v559 = vmul.f32 %v558, 0.6931472
      %v560 = vlog2.pop %v537
      %v561 = vmul.f32 %v560, 0.6931472
      %v562 = vmul.f32 %v539, 0.15
      %v563 = vmul.f32 %v541, 0.15
      %v564 = vmul.f32 %v543, 0.15
      %v565 = vmul.f32 %v545, 0.15
      %v566 = vmul.f32 %v547, 0.15
      %v567 = vmul.f32 %v549, 0.15
      %v568 = vmul.f32 %v562, 1.442695
      %v569 = vpow.pop %v568
      %v570 = vmul.f32 %v563, 1.442695
      %v571 = vpow.pop %v570
      %v572 = vmul.f32 %v564, 1.442695
      %v573 = vpow.pop %v572
      %v574 = vmul.f32 %v565, 1.442695
      %v575 = vpow.pop %v574
      %v576 = vmul.f32 %v566, 1.442695
      %v577 = vpow.pop %v576
      %v578 = vmul.f32 %v567, 1.442695
      %v579 = vpow.pop %v578
      %v580 = vmul.f32 %v551, 0.15
      %v581 = vmul.f32 %v553, 0.15
      %v582 = vmul.f32 %v555, 0.15
      %v583 = vmul.f32 %v557, 0.15
      %v584 = vmul.f32 %v559, 0.15
      %v585 = vmul.f32 %v561, 0.15
      %v586 = vmul.f32 %v580, 1.442695
      %v587 = vpow.pop %v586
      %v588 = vmul.f32 %v581, 1.442695
      %v589 = vpow.pop %v588
      %v590 = vmul.f32 %v582, 1.442695
      %v591 = vpow.pop %v590
      %v592 = vmul.f32 %v583, 1.442695
      %v593 = vpow.pop %v592
      %v594 = vmul.f32 %v584, 1.442695
      %v595 = vpow.pop %v594
      %v596 = vmul.f32 %v585, 1.442695
      %v597 = vpow.pop %v596
      %v598 = vmul.f32 %v539, -0.35
      %v599 = vmul.f32 %v541, -0.35
      %v600 = vmul.f32 %v543, -0.35
      %v601 = vmul.f32 %v545, -0.35
      %v602 = vmul.f32 %v547, -0.35
      %v603 = vmul.f32 %v549, -0.35
      %v604 = vmul.f32 %v598, 1.442695
      %v605 = vpow.pop %v604
      %v606 = vmul.f32 %v599, 1.442695
      %v607 = vpow.pop %v606
      %v608 = vmul.f32 %v600, 1.442695
      %v609 = vpow.pop %v608
      %v610 = vmul.f32 %v601, 1.442695
      %v611 = vpow.pop %v610
      %v612 = vmul.f32 %v602, 1.442695
      %v613 = vpow.pop %v612
      %v614 = vmul.f32 %v603, 1.442695
      %v615 = vpow.pop %v614
      %v616 = vmul.f32 %v551, -0.35
      %v617 = vmul.f32 %v553, -0.35
      %v618 = vmul.f32 %v555, -0.35
      %v619 = vmul.f32 %v557, -0.35
      %v620 = vmul.f32 %v559, -0.35
      %v621 = vmul.f32 %v561, -0.35
      %v622 = vmul.f32 %v616, 1.442695
      %v623 = vpow.pop %v622
      %v624 = vmul.f32 %v617, 1.442695
      %v625 = vpow.pop %v624
      %v626 = vmul.f32 %v618, 1.442695
      %v627 = vpow.pop %v626
      %v628 = vmul.f32 %v619, 1.442695
      %v629 = vpow.pop %v628
      %v630 = vmul.f32 %v620, 1.442695
      %v631 = vpow.pop %v630
      %v632 = vmul.f32 %v621, 1.442695
      %v633 = vpow.pop %v632
      %v634 = vsub.f32 %v587, %v569
      %v635 = vsub.f32 %v589, %v571
      %v636 = vsub.f32 %v591, %v573
      %v637 = vsub.f32 %v593, %v575
      %v638 = vsub.f32 %v595, %v577
      %v639 = vsub.f32 %v597, %v579
      %v640 = vmul.f32 %v452, %v623
      %v641 = vmul.f32 %v454, %v625
      %v642 = vmul.f32 %v457, %v627
      %v643 = vmul.f32 %v459, %v629
      %v644 = vmul.f32 %v462, %v631
      %v645 = vmul.f32 %v464, %v633
      %v646 = vmul.f32 %v380, %v605
      %v647 = vmul.f32 %v382, %v607
      %v648 = vmul.f32 %v385, %v609
      %v649 = vmul.f32 %v387, %v611
      %v650 = vmul.f32 %v390, %v613
      %v651 = vmul.f32 %v392, %v615
      %v652 = vsub.f32 %v640, %v646
      %v653 = vsub.f32 %v641, %v647
      %v654 = vsub.f32 %v642, %v648
      %v655 = vsub.f32 %v643, %v649
      %v656 = vsub.f32 %v644, %v650
      %v657 = vsub.f32 %v645, %v651
      %v658 = vmul.f32 %v476, %v623
      %v659 = vmul.f32 %v478, %v625
      %v660 = vmul.f32 %v481, %v627
      %v661 = vmul.f32 %v483, %v629
      %v662 = vmul.f32 %v486, %v631
      %v663 = vmul.f32 %v488, %v633
      %v664 = vmul.f32 %v404, %v605
      %v665 = vmul.f32 %v406, %v607
      %v666 = vmul.f32 %v409, %v609
      %v667 = vmul.f32 %v411, %v611
      %v668 = vmul.f32 %v414, %v613
      %v669 = vmul.f32 %v416, %v615
      %v670 = vsub.f32 %v658, %v664
      %v671 = vsub.f32 %v659, %v665
      %v672 = vsub.f32 %v660, %v666
      %v673 = vsub.f32 %v661, %v667
      %v674 = vsub.f32 %v662, %v668
      %v675 = vsub.f32 %v663, %v669
      %v676 = vmul.f32 %v634, %v634
      %v677 = vmul.f32 %v635, %v635
      %v678 = vmul.f32 %v636, %v636
      %v679 = vmul.f32 %v637, %v637
      %v680 = vmul.f32 %v638, %v638
      %v681 = vmul.f32 %v639, %v639
      %v682 = vmul.f32 %v676, 0.00034213098
      %v683 = vmul.f32 %v677, 0.00034213098
      %v684 = vmul.f32 %v678, 0.00034213098
      %v685 = vmul.f32 %v679, 0.00034213098
      %v686 = vmul.f32 %v680, 0.00034213098
      %v687 = vmul.f32 %v681, 0.00034213098
      %v688 = vmul.f32 %v652, %v652
      %v689 = vmul.f32 %v653, %v653
      %v690 = vmul.f32 %v654, %v654
      %v691 = vmul.f32 %v655, %v655
      %v692 = vmul.f32 %v656, %v656
      %v693 = vmul.f32 %v657, %v657
      %v694 = vmul.f32 %v670, %v670
      %v695 = vmul.f32 %v671, %v671
      %v696 = vmul.f32 %v672, %v672
      %v697 = vmul.f32 %v673, %v673
      %v698 = vmul.f32 %v674, %v674
      %v699 = vmul.f32 %v675, %v675
      %v700 = vadd.f32 %v688, %v694
      %v701 = vadd.f32 %v689, %v695
      %v702 = vadd.f32 %v690, %v696
      %v703 = vadd.f32 %v691, %v697
      %v704 = vadd.f32 %v692, %v698
      %v705 = vadd.f32 %v693, %v699
      %v706 = vmul.f32 %v700, 7.3313786e-05
      %v707 = vmul.f32 %v701, 7.3313786e-05
      %v708 = vmul.f32 %v702, 7.3313786e-05
      %v709 = vmul.f32 %v703, 7.3313786e-05
      %v710 = vmul.f32 %v704, 7.3313786e-05
      %v711 = vmul.f32 %v705, 7.3313786e-05
      %v712 = vadd.f32 %v682, %v706
      %v713 = vadd.f32 %v683, %v707
      %v714 = vadd.f32 %v684, %v708
      %v715 = vadd.f32 %v685, %v709
      %v716 = vadd.f32 %v686, %v710
      %v717 = vadd.f32 %v687, %v711
      %v718 = vadd.f32 %v712, %v713
      %v719 = vadd.f32 %v718, %v714
      %v720 = vadd.f32 %v719, %v715
      %v721 = vadd.f32 %v720, %v716
      %v722 = vadd.f32 %v721, %v717
      %v723 = vrot.slane %v722, 4
      %v724 = vadd.f32 %v722, %v723
      %v725 = vrot.slane %v724, 2
      %v726 = vadd.f32 %v724, %v725
      %v727 = vrot.slane %v726, 1
      %v728 = vadd.f32 %v726, %v727
      %729 = vst [vmem:[%s232] sm:$0xff] %v728
      %p730 = scmp.lt.s32.totalorder %s14, 1
      %s731 = scalar_select %p730, %s14, 1
      %s732 = smul.addr %s731, 8
      %s733 = scalar_lea.vmem %s3, %s732
      // Predicated region
      $region33: #{a_call__.1} parent=31 // pred_check
        %p734 = pneg %p105
      $region34: #{a_call__.1} parent=31 // pred_check_branch
        %736 = sbr.rel (%p734) target = $region36
      $region35: #{a_call__.1} parent=31 // pred_region
        _
      $region36: #{a_call__.1} parent=31 // pred_fallthru
        _
    $region32: #{a_call__.1} parent=5 // pred_fallthru
      _
    %p737 = scmp.le.s32.totalorder 2, %s9
    // Predicated region
    $region37: #{a_call__.1} parent=5 // pred_check
      %p738 = pneg %p737
    $region38: #{a_call__.1} parent=5 // pred_check_branch
      %740 = sbr.rel (%p738) target = $region40
    $region39: #{a_call__.1} parent=5 // pred_region
      %s741 = ssub.s32 %s9, 2
      // Predicated region
      $region41: #{a_call__.1} parent=39 // pred_check
        %p742 = pneg %p111
      $region42: #{a_call__.1} parent=39 // pred_check_branch
        %744 = sbr.rel (%p742) target = $region44
      $region43: #{a_call__.1} parent=39 // pred_region
        %p745 = scmp.lt.s32.totalorder %s15, 1
        %s746 = scalar_select %p745, %s15, 1
        %s747 = smul.addr %s746, 8
        %s748 = scalar_lea.vmem %s3, %s747
      $region44: #{a_call__.1} parent=39 // pred_fallthru
        _
    $region40: #{a_call__.1} parent=5 // pred_fallthru
      _
  $region6: #{a_call__.1} parent=0 // loop_footer
    %s13 = sadd.s32 1, %s9
  $region7: #{a_call__.1} parent=0 // loop_footer_branch
    %8 = sbr.rel target = $region3
  $region8: #{a_call__.1} parent=0 // loop_exit
    _

</llo_original>
